<compile_context>
chip_gen: v5e
topology: v5e:2x2
jax: 0.10.0
libtpu: 0.0.40
codegen_flags: <defaults>
</compile_context>

<pallas_src>
import jax
import jax.numpy as jnp
from jax.experimental import pallas as pl
from jax.experimental.pallas import tpu as pltpu

PSSM_DIM = 20
EMBED_DIM = 40                       # embedding_dim (multiple of 20)
C_OUT = EMBED_DIM // PSSM_DIM        # conv out-channels == upsample scale
BN_EPS = 1e-5


# ----------------------------- shared kernel ---------------------------------
def _affine_kernel(x_ref, w_ref, b_ref, o_ref):
    # x_ref: (TN, 20), w_ref: (20, D), b_ref: (1, D), o_ref: (TN, D)
    acc = jnp.dot(x_ref[...], w_ref[...], preferred_element_type=jnp.float32)
    o_ref[...] = (acc + b_ref[...]).astype(o_ref.dtype)   # single dense store


def _pick_tile(n, tile_n):
    # Keep >= 2 grid steps when possible (v7x has 2 TensorCores) and keep the
    # row tile a multiple of 8 (sublane granularity).
    half = (n + 1) // 2
    half8 = max(8, ((half + 7) // 8) * 8)
    return min(max(tile_n, 8), half8)


def _affine_forward(x2d, w, b, *, tile_n=1024):
    n = x2d.shape[0]
    d = w.shape[1]
    tn = _pick_tile(n, tile_n)
    n_pad = pl.cdiv(n, tn) * tn
    x_p = x2d if n_pad == n else jnp.pad(x2d, ((0, n_pad - n), (0, 0)))

    out = pl.pallas_call(
        _affine_kernel,
        out_shape=jax.ShapeDtypeStruct((n_pad, d), x2d.dtype),
        grid=(n_pad // tn,),
        in_specs=[
            pl.BlockSpec((tn, PSSM_DIM), lambda i: (i, 0)),
            pl.BlockSpec((PSSM_DIM, d), lambda i: (0, 0)),   # resident weights
            pl.BlockSpec((1, d), lambda i: (0, 0)),          # resident bias row
        ],
        out_specs=pl.BlockSpec((tn, d), lambda i: (i, 0)),
        compiler_params=pltpu.CompilerParams(dimension_semantics=("parallel",)),
    )(x_p, w.astype(x2d.dtype), b.astype(x2d.dtype))

    return out if n_pad == n else out[:n]


# ------------------- per-method (20 -> D) affine constants --------------------
def _linear_affine(w_lin, b_lin):
    # w_lin is already (20, D) (PyTorch nn.Linear stores (D, 20); transpose when porting)
    return w_lin, b_lin.reshape(1, -1)


def _conv_bn_affine(w_conv, b_conv, bn_scale, bn_shift):
    # Fold eval-mode BatchNorm into the conv, then express
    # Conv1d(1, C, k=3, pad=1) as a dense (20 -> C*20) map.
    # Output ordering matches .view(batch, length, -1): column = c*20 + t.
    w_eff = w_conv * bn_scale[:, None]                 # (C, 3)
    b_eff = b_conv * bn_scale + bn_shift               # (C,)
    tp = jnp.arange(PSSM_DIM)[:, None]                 # input position
    t = jnp.arange(PSSM_DIM)[None, :]                  # output position within group
    k = tp - t + 1                                     # tap index; valid in [0, 3)
    valid = (k >= 0) & (k <= 2)
    band = jnp.where(valid[None, :, :],
                     w_eff[:, jnp.clip(k, 0, 2)], 0.0)         # (C, 20, 20)
    w_mat = jnp.transpose(band, (1, 0, 2)).reshape(PSSM_DIM, C_OUT * PSSM_DIM)
    b_row = jnp.repeat(b_eff, PSSM_DIM)[None, :]       # (1, C*20)
    return w_mat, b_row


def _upsample_affine(dtype):
    # Nearest upsample by C_OUT: out[:, t*C_OUT + k] = x[:, t]  ==  x @ R.
    d = C_OUT * PSSM_DIM
    r = (jnp.arange(d)[None, :] // C_OUT
         == jnp.arange(PSSM_DIM)[:, None]).astype(dtype)       # (20, D)
    return r, jnp.zeros((1, d), dtype)


# ------------------------------ module wrapper --------------------------------
def pssm_embedding_forward(x, method, params, *, tile_n=1024):
    batch, length, _ = x.shape
    x2d = x.reshape(batch * length, PSSM_DIM)          # == .view(B*L, 1, -1)
    if method == "linear":
        w, b = _linear_affine(params["w_lin"], params["b_lin"])
    elif method == "conv":
        w, b = _conv_bn_affine(params["w_conv"], params["b_conv"],
                               params["bn_scale"], params["bn_shift"])
    elif method == "upsample":
        w, b = _upsample_affine(x2d.dtype)
    else:
        raise ValueError(method)
    out = _affine_forward(x2d, w, b, tile_n=tile_n)
    return out.reshape(batch, length, -1)               # == .view(B, L, -1)


# -------------------------------- references ----------------------------------
def _ref_linear(x2d, w, b):
    return x2d @ w + b


def _ref_conv(x2d, w, b, scale, shift):
    n = x2d.shape[0]
    xpad = jnp.pad(x2d, ((0, 0), (1, 1)))
    taps = jnp.stack([xpad[:, k:k + PSSM_DIM] for k in range(3)], axis=-1)
    y = jnp.einsum("ntk,ck->nct", taps, w) + b[None, :, None]
    y = y * scale[None, :, None] + shift[None, :, None]
    return y.reshape(n, C_OUT * PSSM_DIM)


def _ref_upsample(x2d):
    return jnp.repeat(x2d, C_OUT, axis=1)


if __name__ == "__main__":
    key = jax.random.PRNGKey(0)
    ks = jax.random.split(key, 10)
    batch, length = 2, 8
    x = jax.random.normal(ks[0], (batch, length, PSSM_DIM), jnp.float32)

    # deterministic parameter init (module __init__ shapes)
    w_lin = jax.random.normal(ks[1], (PSSM_DIM, EMBED_DIM), jnp.float32) * 0.1
    b_lin = jax.random.normal(ks[2], (1, EMBED_DIM), jnp.float32) * 0.1
    w_conv = jax.random.normal(ks[3], (C_OUT, 3), jnp.float32) * 0.1   # (C,1,3) squeezed
    b_conv = jax.random.normal(ks[4], (C_OUT,), jnp.float32) * 0.1
    bn_gamma = 1.0 + 0.1 * jax.random.normal(ks[5], (C_OUT,), jnp.float32)
    bn_beta = 0.1 * jax.random.normal(ks[6], (C_OUT,), jnp.float32)
    bn_mean = 0.1 * jax.random.normal(ks[7], (C_OUT,), jnp.float32)
    bn_var = 0.5 + jax.random.uniform(ks[8], (C_OUT,), jnp.float32)
    bn_scale = bn_gamma / jnp.sqrt(bn_var + BN_EPS)
    bn_shift = bn_beta - bn_mean * bn_scale

    params = dict(w_lin=w_lin, b_lin=b_lin, w_conv=w_conv, b_conv=b_conv,
                  bn_scale=bn_scale, bn_shift=bn_shift)

    x2d = x.reshape(batch * length, PSSM_DIM)
    refs = {
        "linear": _ref_linear(x2d, w_lin, b_lin),
        "conv": _ref_conv(x2d, w_conv, b_conv, bn_scale, bn_shift),
        "upsample": _ref_upsample(x2d),
    }

    for method in ("linear", "conv", "upsample"):
        out = jax.block_until_ready(pssm_embedding_forward(x, method, params))
        assert out.shape == (batch, length, EMBED_DIM), (method, out.shape)
        ref = refs[method].reshape(batch, length, EMBED_DIM)
        assert jnp.allclose(out, ref, atol=1e-5, rtol=1e-5), method

    # also exercise a tail that is NOT a multiple of the row tile
    xb = jax.random.normal(ks[9], (3, 7, PSSM_DIM), jnp.float32)
    outb = jax.block_until_ready(pssm_embedding_forward(xb, "conv", params, tile_n=8))
    refb = _ref_conv(xb.reshape(21, PSSM_DIM), w_conv, b_conv, bn_scale, bn_shift)
    assert jnp.allclose(outb, refb.reshape(3, 7, EMBED_DIM), atol=1e-5, rtol=1e-5)

    print("KERNEL_OK")
</pallas_src>

<mosaic_0001>
module attributes {stable_mosaic.version = 11 : i64} {
  func.func @_affine_kernel(%arg0: i32, %arg1: memref<8x20xf32, #tpu.memory_space<vmem>>, %arg2: memref<20x40xf32, #tpu.memory_space<vmem>>, %arg3: memref<1x40xf32, #tpu.memory_space<vmem>>, %arg4: memref<8x40xf32, #tpu.memory_space<vmem>>) attributes {dimension_semantics = [#tpu.dimension_semantics<parallel>], iteration_bounds = array<i64: 2>, scalar_prefetch = 0 : i64, scratch_operands = 0 : i64, tpu.core_type = #tpu.core_type<tc>, window_params = [{transform_indices = @transform_0, window_bounds = array<i64: 8, 20>}, {pipeline_mode = #tpu.pipeline_mode<synchronous>, transform_indices = @transform_1, window_bounds = array<i64: 20, 40>}, {pipeline_mode = #tpu.pipeline_mode<synchronous>, transform_indices = @transform_2, window_bounds = array<i64: 1, 40>}, {transform_indices = @transform_3, window_bounds = array<i64: 8, 40>}]} {
    %c0 = arith.constant 0 : index
    %c0_0 = arith.constant 0 : index
    %0 = vector.load %arg1[%c0, %c0_0] : memref<8x20xf32, #tpu.memory_space<vmem>>, vector<8x20xf32>
    %c0_1 = arith.constant 0 : index
    %c0_2 = arith.constant 0 : index
    %1 = vector.load %arg2[%c0_1, %c0_2] : memref<20x40xf32, #tpu.memory_space<vmem>>, vector<20x40xf32>
    %cst = arith.constant dense<0.000000e+00> : vector<8x40xf32>
    %2 = tpu.matmul %0, %1, %cst {dimension_numbers = #tpu.dot_dimension_numbers<[1], [0], [0], [1], [0, 0, 1, 1], [], []>} : vector<8x20xf32>, vector<20x40xf32>, vector<8x40xf32> -> vector<8x40xf32>
    %c0_3 = arith.constant 0 : index
    %c0_4 = arith.constant 0 : index
    %3 = vector.load %arg3[%c0_3, %c0_4] : memref<1x40xf32, #tpu.memory_space<vmem>>, vector<1x40xf32>
    %4 = vector.broadcast %3 : vector<1x40xf32> to vector<8x40xf32>
    %5 = arith.addf %2, %4 : vector<8x40xf32>
    %c0_5 = arith.constant 0 : index
    %c0_6 = arith.constant 0 : index
    %6 = vector.load %arg4[%c0_5, %c0_6] : memref<8x40xf32, #tpu.memory_space<vmem>>, vector<8x40xf32>
    tpu.vector_store %arg4[%c0_5, %c0_6], %5 {strides = array<i32>} : memref<8x40xf32, #tpu.memory_space<vmem>>, vector<8x40xf32>,
    return
  }
  func.func @transform_0(%arg0: i32) -> (i32, i32) {
    %c0_i32 = arith.constant 0 : i32
    %c0_i32_0 = arith.constant 0 : i32
    return %arg0, %c0_i32 : i32, i32
  }
  func.func @transform_1(%arg0: i32) -> (i32, i32) {
    %c0_i32 = arith.constant 0 : i32
    %c0_i32_0 = arith.constant 0 : i32
    %c0_i32_1 = arith.constant 0 : i32
    return %c0_i32, %c0_i32_0 : i32, i32
  }
  func.func @transform_2(%arg0: i32) -> (i32, i32) {
    %c0_i32 = arith.constant 0 : i32
    %c0_i32_0 = arith.constant 0 : i32
    %c0_i32_1 = arith.constant 0 : i32
    return %c0_i32, %c0_i32_0 : i32, i32
  }
  func.func @transform_3(%arg0: i32) -> (i32, i32) {
    %c0_i32 = arith.constant 0 : i32
    %c0_i32_0 = arith.constant 0 : i32
    return %arg0, %c0_i32 : i32, i32
  }
}

</mosaic_0001>

<llo_original>
// kernel: tpu_custom_call.1
$region0: #{tpu_custom_call.1}
  #allocation0 [shape = 'u32[]', space=smem, size = 0x4, offset = 0x4, fixed_abs, tag = 'smem constant byte address 0x4 - core index']
  #allocation1 [shape = 'u32[72,128]{1,0:T(1,128)}', space=vmem, size = 0x9000, scoped, tag = 'internal scratch']
  %s0 = inlined_call_operand.hbm [shape: f32[16,20], index: 0, kind: input, shape index: {}]
  %s1 = inlined_call_operand.hbm [shape: f32[20,40], index: 1, kind: input, shape index: {}]
  %s2 = inlined_call_operand.vmem [shape: f32[1,40], index: 2, kind: input, shape index: {}]
  %s3 = inlined_call_operand.hbm [shape: f32[16,40], index: 3, kind: output, shape index: {}]
  %s4 = sld [smem:[#allocation0]]
  $region53: #{tpu_custom_call.1} parent=0
    _
  %s6 = ssub.s32 1, %s4
  %s7 = scalar_select 0, %s6, %s4
  $region1: #{tpu_custom_call.1} parent=0
    #allocation2 [shape = 'u8[8192]{0}', space=vmem, size = 0x2000, scoped, tag = 'input window, operand 0']
    #allocation3 [shape = 's32[2]{0}', space=sflag, size = 0x8, scoped, tag = 'scoped memory for tpu_custom_call.1']
    #allocation4 [shape = 's32[2]{0}', space=sflag, size = 0x8, scoped, tag = 'scoped memory for tpu_custom_call.1']
    #allocation5 [shape = 'u8[12288]{0}', space=vmem, size = 0x3000, scoped, tag = 'input window, operand 1, single buffered']
    #allocation6 [shape = 's32[1]{0}', space=sflag, size = 0x4, scoped, tag = 'scoped memory for tpu_custom_call.1']
    #allocation7 [shape = 'u8[8192]{0}', space=vmem, size = 0x2000, scoped, tag = 'output window, operand 0']
    %8 = vsyncpa [#allocation3], 0
    %s9 = scalar_lea.sflag [#allocation3], 1
    %10 = vsyncpa %s9, 0
    %11 = vsyncpa [#allocation6], 0
    %12 = vsyncpa [#allocation4], 0
    %s13 = scalar_lea.sflag [#allocation4], 1
    %14 = vsyncpa %s13, 0
    loop: start=0, step=1, limit=4
    $region2: #{tpu_custom_call.1} parent=1 // loop_pre_header
      _
    $region3: #{tpu_custom_call.1} parent=1 // loop_header
      %s16 = sphi 0, %s20
      %p17 = scmp.ge.s32.totalorder %s16, 4
      %s26 = sphi 0, %s28
      %s29 = sphi 0, %s26
      %s30 = sphi 0, %s29
      %s46 = sphi 0, %s30
      %s50 = sphi 0, %s50
      %s52 = sphi 0, %s50
      %s53 = sphi 0, %s52
      %s67 = sphi 0, %s53
      %s71 = sphi 0, %s71
      %s73 = sphi 0, %s71
      %s74 = sphi 0, %s73
      %s88 = sphi 0, %s74
      %s94 = sphi 0, %s96
      %s97 = sphi 0, %s94
      %s98 = sphi 0, %s97
      %s114 = sphi 0, %s98
    $region4: #{tpu_custom_call.1} parent=1 // loop_header_branch
      %19 = sbr.rel (%p17) target = $region8
    $region5: #{tpu_custom_call.1} parent=1 // loop_body
      %s21 = ssub.s32 %s16, 1
      %s22 = ssub.s32 %s16, 2
      %s23 = sadd.s32 %s16, 1
      %s24 = ssub.s32 %s16, %s23
      %p25 = scmp.eq.s32.totalorder %s24, 0
      %s27 = sadd.s32 %s26, 1
      %s28 = scalar_select %p25, %s26, %s27
      %p31 = pneg %p25
      %p32 = scmp.eq.s32.totalorder %s16, 1
      %p33 = por %p31, %p32
      %p34 = scmp.ne.s32.totalorder %s26, %s29
      %p35 = scmp.eq.s32.totalorder %s16, 0
      %p36 = por %p34, %p35
      %p37 = scmp.ne.s32.totalorder %s26, %s29
      %p38 = scmp.eq.s32.totalorder %s21, 1
      %p39 = por %p37, %p38
      %p40 = scmp.ne.s32.totalorder %s29, %s30
      %p41 = scmp.eq.s32.totalorder %s21, 0
      %p42 = por %p40, %p41
      %p43 = scmp.ne.s32.totalorder %s29, %s30
      %p44 = scmp.eq.s32.totalorder %s22, 1
      %p45 = por %p43, %p44
      %p47 = scmp.ne.s32.totalorder %s30, %s46
      %p48 = scmp.eq.s32.totalorder %s22, 0
      %p49 = por %p47, %p48
      %s51 = sadd.s32 %s50, 1
      %p54 = scmp.eq.s32.totalorder %s16, 1
      %p55 = scmp.ne.s32.totalorder %s50, %s52
      %p56 = scmp.eq.s32.totalorder %s16, 0
      %p57 = por %p55, %p56
      %p58 = scmp.ne.s32.totalorder %s50, %s52
      %p59 = scmp.eq.s32.totalorder %s21, 1
      %p60 = por %p58, %p59
      %p61 = scmp.ne.s32.totalorder %s52, %s53
      %p62 = scmp.eq.s32.totalorder %s21, 0
      %p63 = por %p61, %p62
      %p64 = scmp.ne.s32.totalorder %s52, %s53
      %p65 = scmp.eq.s32.totalorder %s22, 1
      %p66 = por %p64, %p65
      %p68 = scmp.ne.s32.totalorder %s53, %s67
      %p69 = scmp.eq.s32.totalorder %s22, 0
      %p70 = por %p68, %p69
      %s72 = sadd.s32 %s71, 1
      %p75 = scmp.eq.s32.totalorder %s16, 1
      %p76 = scmp.ne.s32.totalorder %s71, %s73
      %p77 = scmp.eq.s32.totalorder %s16, 0
      %p78 = por %p76, %p77
      %p79 = scmp.ne.s32.totalorder %s71, %s73
      %p80 = scmp.eq.s32.totalorder %s21, 1
      %p81 = por %p79, %p80
      %p82 = scmp.ne.s32.totalorder %s73, %s74
      %p83 = scmp.eq.s32.totalorder %s21, 0
      %p84 = por %p82, %p83
      %p85 = scmp.ne.s32.totalorder %s73, %s74
      %p86 = scmp.eq.s32.totalorder %s22, 1
      %p87 = por %p85, %p86
      %p89 = scmp.ne.s32.totalorder %s74, %s88
      %p90 = scmp.eq.s32.totalorder %s22, 0
      %p91 = por %p89, %p90
      %s92 = ssub.s32 %s16, %s23
      %p93 = scmp.eq.s32.totalorder %s92, 0
      %s95 = sadd.s32 %s94, 1
      %s96 = scalar_select %p93, %s94, %s95
      %p99 = pneg %p93
      %p100 = scmp.eq.s32.totalorder %s16, 1
      %p101 = por %p99, %p100
      %p102 = scmp.ne.s32.totalorder %s94, %s97
      %p103 = scmp.eq.s32.totalorder %s16, 0
      %p104 = por %p102, %p103
      %p105 = scmp.ne.s32.totalorder %s94, %s97
      %p106 = scmp.eq.s32.totalorder %s21, 1
      %p107 = por %p105, %p106
      %p108 = scmp.ne.s32.totalorder %s97, %s98
      %p109 = scmp.eq.s32.totalorder %s21, 0
      %p110 = por %p108, %p109
      %p111 = scmp.ne.s32.totalorder %s97, %s98
      %p112 = scmp.eq.s32.totalorder %s22, 1
      %p113 = por %p111, %p112
      %p115 = scmp.ne.s32.totalorder %s98, %s114
      %p116 = scmp.eq.s32.totalorder %s22, 0
      %p117 = por %p115, %p116
      %p118 = scmp.le.s32.totalorder 1, %s16
      %p119 = scmp.lt.s32.totalorder %s16, 3
      %p120 = pnand %p118, %p119
      %p121 = pneg %p120
      // Predicated region
      $region9: #{tpu_custom_call.1} parent=5 // pred_check
        _
      $region10: #{tpu_custom_call.1} parent=5 // pred_check_branch
        %123 = sbr.rel (%p120) target = $region12
      $region11: #{tpu_custom_call.1} parent=5 // pred_region
        %s124 = ssub.s32 %s16, 1
        // Predicated region
        $region13: #{tpu_custom_call.1} parent=11 // pred_check
          %p125 = pneg %p63
        $region14: #{tpu_custom_call.1} parent=11 // pred_check_branch
          %127 = sbr.rel (%p125) target = $region16
        $region15: #{tpu_custom_call.1} parent=11 // pred_region
          %129 = vsyncadd [#allocation6], 0
          %s130 = sshll.u32 %s1, 4
          %s131 = int_to_ptr.hbm [resolvable:$true] %s130
          %s132 = sshll.u32 [#allocation5], 4
          %s133 = int_to_ptr.vmem [resolvable:$true] %s132
          %138 = dma.hbm_to_vmem [thread:$0]  %s131, 384, %s133, [#allocation6], 128, 128, 8
        $region16: #{tpu_custom_call.1} parent=11 // pred_fallthru
          _
        // Predicated region
        $region17: #{tpu_custom_call.1} parent=11 // pred_check
          %p139 = pneg %p84
        $region18: #{tpu_custom_call.1} parent=11 // pred_check_branch
          %141 = sbr.rel (%p139) target = $region20
        $region19: #{tpu_custom_call.1} parent=11 // pred_region
          _
        $region20: #{tpu_custom_call.1} parent=11 // pred_fallthru
          _
      $region12: #{tpu_custom_call.1} parent=5 // pred_fallthru
        _
      %p142 = scmp.lt.s32.totalorder %s16, 2
      // Predicated region
      $region21: #{tpu_custom_call.1} parent=5 // pred_check
        %p143 = pneg %p142
      $region22: #{tpu_custom_call.1} parent=5 // pred_check_branch
        %145 = sbr.rel (%p143) target = $region24
      $region23: #{tpu_custom_call.1} parent=5 // pred_region
        // Predicated region
        $region25: #{tpu_custom_call.1} parent=23 // pred_check
          %p146 = pneg %p36
        $region26: #{tpu_custom_call.1} parent=23 // pred_check_branch
          %148 = sbr.rel (%p146) target = $region28
        $region27: #{tpu_custom_call.1} parent=23 // pred_region
          %s149 = sand.u32 %s26, 1
          %s150 = scalar_lea.sflag [#allocation3], %s149
          %s151 = sand.u32 %s26, 1
          %s152 = smul.addr %s151, 8
          %s153 = scalar_lea.vmem [#allocation2], %s152
          %155 = vsyncadd %s150, 0
          %s156 = smul.addr %s16, 8
          %s157 = scalar_lea.hbm %s0, %s156
          %s159 = sshll.u32 %s157, 4
          %s160 = int_to_ptr.hbm [resolvable:$true] %s159
          %s161 = sshll.u32 %s153, 4
          %s162 = int_to_ptr.vmem [resolvable:$true] %s161
          %164 = dma.hbm_to_vmem [thread:$0]  %s160, 128, %s162, %s150
        $region28: #{tpu_custom_call.1} parent=23 // pred_fallthru
          _
      $region24: #{tpu_custom_call.1} parent=5 // pred_fallthru
        _
      %p165 = scmp.le.s32.totalorder 1, %s16
      %p166 = scmp.lt.s32.totalorder %s16, 3
      %p167 = pnand %p165, %p166
      %p168 = pneg %p167
      // Predicated region
      $region29: #{tpu_custom_call.1} parent=5 // pred_check
        _
      $region30: #{tpu_custom_call.1} parent=5 // pred_check_branch
        %170 = sbr.rel (%p167) target = $region32
      $region31: #{tpu_custom_call.1} parent=5 // pred_region
        %s171 = ssub.s32 %s16, 1
        %s172 = sand.u32 %s29, 1
        %s173 = scalar_lea.sflag [#allocation3], %s172
        %s174 = sand.u32 %s29, 1
        %s175 = smul.addr %s174, 8
        %s176 = scalar_lea.vmem [#allocation2], %s175
        // Predicated region
        $region33: #{tpu_custom_call.1} parent=31 // pred_check
          %p177 = pneg %p42
        $region34: #{tpu_custom_call.1} parent=31 // pred_check_branch
          %179 = sbr.rel (%p177) target = $region36
        $region35: #{tpu_custom_call.1} parent=31 // pred_region
          %181 = dma.done %s173, 128
        $region36: #{tpu_custom_call.1} parent=31 // pred_fallthru
          _
        // Predicated region
        $region37: #{tpu_custom_call.1} parent=31 // pred_check
          %p182 = pneg %p63
        $region38: #{tpu_custom_call.1} parent=31 // pred_check_branch
          %184 = sbr.rel (%p182) target = $region40
        $region39: #{tpu_custom_call.1} parent=31 // pred_region
          %186 = dma.done [#allocation6], 384
        $region40: #{tpu_custom_call.1} parent=31 // pred_fallthru
          _
        %s187 = sand.u32 %s29, 1
        %s188 = scalar_lea.sflag [#allocation3], %s187
        %s189 = sand.u32 %s29, 1
        %s190 = smul.addr %s189, 8
        %s191 = scalar_lea.vmem [#allocation2], %s190
        %p192 = pneg %p42
        %p193 = pneg %p39
        %p194 = pneg %p63
        %p195 = pneg %p60
        %p196 = pneg %p84
        %p197 = pneg %p81
        %p198 = pneg %p110
        %p199 = pneg %p107
        %s200 = sand.u32 %s97, 1
        %s201 = scalar_lea.sflag [#allocation4], %s200
        %s202 = sand.u32 %s97, 1
        %s203 = smul.addr %s202, 8
        %s204 = scalar_lea.vmem [#allocation7], %s203
        %v205 = vld [vmem:[%s176] sm:$0xff]
        %v206 = vld [vmem:[#allocation5] sm:$0xff]
        %v207 = vld [vmem:[#allocation5 + $0x8] sm:$0xff]
        %v208 = vld [vmem:[#allocation5 + $0x10] sm:$0xf]
        %v209 = vld [vmem:[%s2] sm:$0x1]
        %v211 = vperm.slane %v209, 0
        %vm213 = vcmask 162816
        %v215 = vsel %vm213, %v205, 0
        %vm217 = vcmask 1043456
        %v219 = vsel %vm217, %v208, 0
        %221 = vmatpush.msra.mxu0 0.0
        %222 = vmatpush.msra.mxu0 0.0
        %223 = vmatpush.msra.mxu0 0.0
        %224 = vmatpush.msra.mxu0 0.0
        %225 = vmatpush.msra.mxu0 0.0
        %226 = vmatpush.msra.mxu0 0.0
        %227 = vmatpush.msra.mxu0 0.0
        %228 = vmatpush.msra.mxu0 0.0
        %229 = vmatpush.msra.mxu0 0.0
        %230 = vmatpush.msra.mxu0 0.0
        %231 = vmatpush.msra.mxu0 0.0
        %232 = vmatpush.msra.mxu0 0.0
        %233 = vmatpush.msra.mxu0 0.0
        %234 = vmatpush.msra.mxu0 %v219
        %235 = vmatpush.msra.mxu0 %v207
        %236 = vmatpush.msra.mxu0 %v206
        %237 = vmatmul.f32.gmra.mxu0 %v215
        %v238 = vpop.f32.mrf.mxu0
        %v239 = vadd.f32 %v211, %v238
        %240 = vdwg.mxu0
        %vm241 = vcmask 326656
        %242 = vst.msk [vmem:[%s204] sm:$0xff] %vm241, %v239
        %s243 = sand.u32 %s97, 1
        %s244 = scalar_lea.sflag [#allocation4], %s243
        %s245 = sand.u32 %s97, 1
        %s246 = smul.addr %s245, 8
        %s247 = scalar_lea.vmem [#allocation7], %s246
        // Predicated region
        $region41: #{tpu_custom_call.1} parent=31 // pred_check
          %p248 = pneg %p107
        $region42: #{tpu_custom_call.1} parent=31 // pred_check_branch
          %250 = sbr.rel (%p248) target = $region44
        $region43: #{tpu_custom_call.1} parent=31 // pred_region
          %252 = vsyncadd %s244, 0
          %s253 = smul.addr %s21, 8
          %s254 = scalar_lea.hbm %s3, %s253
          %s256 = sshll.u32 %s247, 4
          %s257 = int_to_ptr.vmem [resolvable:$true] %s256
          %s258 = sshll.u32 %s254, 4
          %s259 = int_to_ptr.hbm [resolvable:$true] %s258
          %261 = dma.vmem_to_hbm [thread:$0]  %s257, 128, %s259, %s244
        $region44: #{tpu_custom_call.1} parent=31 // pred_fallthru
          _
      $region32: #{tpu_custom_call.1} parent=5 // pred_fallthru
        _
      %p262 = scmp.le.s32.totalorder 2, %s16
      // Predicated region
      $region45: #{tpu_custom_call.1} parent=5 // pred_check
        %p263 = pneg %p262
      $region46: #{tpu_custom_call.1} parent=5 // pred_check_branch
        %265 = sbr.rel (%p263) target = $region48
      $region47: #{tpu_custom_call.1} parent=5 // pred_region
        %s266 = ssub.s32 %s16, 2
        // Predicated region
        $region49: #{tpu_custom_call.1} parent=47 // pred_check
          %p267 = pneg %p113
        $region50: #{tpu_custom_call.1} parent=47 // pred_check_branch
          %269 = sbr.rel (%p267) target = $region52
        $region51: #{tpu_custom_call.1} parent=47 // pred_region
          %s270 = sand.u32 %s98, 1
          %s271 = scalar_lea.sflag [#allocation4], %s270
          %s272 = sand.u32 %s98, 1
          %s273 = smul.addr %s272, 8
          %s274 = scalar_lea.vmem [#allocation7], %s273
          %276 = dma.done %s271, 128
        $region52: #{tpu_custom_call.1} parent=47 // pred_fallthru
          _
      $region48: #{tpu_custom_call.1} parent=5 // pred_fallthru
        _
    $region6: #{tpu_custom_call.1} parent=1 // loop_footer
      %s20 = sadd.s32 1, %s16
    $region7: #{tpu_custom_call.1} parent=1 // loop_footer_branch
      %15 = sbr.rel target = $region3
    $region8: #{tpu_custom_call.1} parent=1 // loop_exit
      _
    %277 = vsyncpa [#allocation3], 1
    %s278 = scalar_lea.sflag [#allocation3], 1
    %279 = vsyncpa %s278, 1
    %280 = vsyncpa [#allocation6], 1
    %281 = vsyncpa [#allocation4], 1
    %s282 = scalar_lea.sflag [#allocation4], 1
    %283 = vsyncpa %s282, 1

</llo_original>
